<compile_context>
chip_gen: v7x
topology: tpu7x:2x2x1
jax: 0.10.0
libtpu: 0.0.40
codegen_flags: <defaults>
</compile_context>

<pallas_src>
import functools

import jax
import jax.numpy as jnp
from jax.experimental import pallas as pl
from jax.experimental.pallas import tpu as pltpu

EPS = 1e-5
H_PAD = 128


def _mlp_kernel(x_ref, w1_ref, b1_ref, g1_ref, be1_ref,
                w2_ref, b2_ref, g2_ref, be2_ref,
                wo_ref, bo_ref,
                o_ref,
                h1_ref, h2_ref, stats_ref,
                *, inv_batch, rows_per_tile, valid_rows):
    # phase 0: layer_1 + ReLU, stash h1, BN1 stats
    # phase 1: BN1 apply, layer_2 + ReLU, stash h2, BN2 stats
    # phase 2: BN2 apply, dropout (identity), layer_out -> lane-packed logits
    phase = pl.program_id(0)
    tile = pl.program_id(1)
    last_tile = pl.num_programs(1) - 1

    row0 = tile * rows_per_tile
    if rows_per_tile % 128 == 0:
        row0 = pl.multiple_of(row0, 128)
    rows = pl.ds(row0, rows_per_tile)

    def masked(h):
        """Zero out padded batch rows so they don't bias the BN statistics."""
        if valid_rows is None:
            return h
        rid = jax.lax.broadcasted_iota(jnp.int32, h.shape, 0) + tile * rows_per_tile
        return jnp.where(rid < valid_rows, h, 0.0)

    def partial_stats(h):                       # -> (2, 128): [sum; sumsq]
        hm = masked(h)
        return jnp.concatenate(
            [jnp.sum(hm, axis=0, keepdims=True),
             jnp.sum(hm * hm, axis=0, keepdims=True)], axis=0)

    def finalize(acc, g_ref, be_ref):           # -> (2, 128): [scale; shift]
        mean = acc[0:1, :] * inv_batch
        var = jnp.maximum(acc[1:2, :] * inv_batch - mean * mean, 0.0)
        scale = g_ref[...] * jax.lax.rsqrt(var + EPS)
        shift = be_ref[...] - mean * scale
        return jnp.concatenate([scale, shift], axis=0)

    # ------------------------- phase 0 ---------------------------------------
    @pl.when(phase == 0)
    def _():
        @pl.when(tile == 0)
        def _():
            stats_ref[...] = jnp.zeros_like(stats_ref)

        h1 = jnp.dot(x_ref[...].astype(jnp.bfloat16), w1_ref[...],
                     preferred_element_type=jnp.float32) + b1_ref[...]
        h1 = jnp.maximum(h1, 0.0)                           # (Bt, 128) f32
        h1_ref[rows, :] = h1.astype(jnp.bfloat16)           # stash for phases 1/2
        stats_ref[0:2, :] += partial_stats(h1)

        @pl.when(tile == last_tile)
        def _():
            stats_ref[2:4, :] = finalize(stats_ref[0:2, :], g1_ref, be1_ref)

    # ------------------------- phase 1 ---------------------------------------
    @pl.when(phase == 1)
    def _():
        coef1 = stats_ref[2:4, :]
        h1n = h1_ref[rows, :].astype(jnp.float32) * coef1[0:1, :] + coef1[1:2, :]
        h2 = jnp.dot(h1n.astype(jnp.bfloat16), w2_ref[...],
                     preferred_element_type=jnp.float32) + b2_ref[...]
        h2 = jnp.maximum(h2, 0.0)
        h2_ref[rows, :] = h2.astype(jnp.bfloat16)
        stats_ref[4:6, :] += partial_stats(h2)

        @pl.when(tile == last_tile)
        def _():
            stats_ref[6:8, :] = finalize(stats_ref[4:6, :], g2_ref, be2_ref)

    # ------------------------- phase 2 ---------------------------------------
    @pl.when(phase == 2)
    def _():
        coef2 = stats_ref[6:8, :]
        h2n = h2_ref[rows, :].astype(jnp.float32) * coef2[0:1, :] + coef2[1:2, :]
        # (1,128) @ (Bt,128)^T on the MXU -> lane-dense (1, Bt) logits.
        logits = jax.lax.dot_general(
            wo_ref[...], h2n.astype(jnp.bfloat16),
            dimension_numbers=(((1,), (1,)), ((), ())),
            preferred_element_type=jnp.float32)
        o_ref[...] = logits + bo_ref[...]


def init_params(key, in_features, hidden=100):
    """PyTorch-shaped parameters; Linear weights stored (in, out) == weight.T."""
    ks = jax.random.split(key, 6)
    s = 0.05
    return {
        "w1": (jax.random.normal(ks[0], (in_features, hidden)) * s).astype(jnp.float32),
        "b1": (jax.random.normal(ks[1], (1, hidden)) * s).astype(jnp.float32),
        "g1": jnp.ones((1, hidden), jnp.float32),       # BatchNorm1d weight
        "beta1": jnp.zeros((1, hidden), jnp.float32),   # BatchNorm1d bias
        "w2": (jax.random.normal(ks[2], (hidden, hidden)) * s).astype(jnp.float32),
        "b2": (jax.random.normal(ks[3], (1, hidden)) * s).astype(jnp.float32),
        "g2": jnp.ones((1, hidden), jnp.float32),
        "beta2": jnp.zeros((1, hidden), jnp.float32),
        "wo": (jax.random.normal(ks[4], (hidden, 1)) * s).astype(jnp.float32),
        "bo": (jax.random.normal(ks[5], (1, 1)) * s).astype(jnp.float32),
    }


def prepare_params(params, h_pad=H_PAD):
    """Pad the hidden dim to 128 lanes and pre-cast matmul weights to bf16.

    Padded bias/gamma/beta lanes are ZERO so padded lanes stay exactly 0
    through ReLU, BN (0*rsqrt(eps)*0 + 0 = 0) and the following matmuls.
    """
    hid = params["w1"].shape[1]
    dh = h_pad - hid
    pad_lane = lambda a: jnp.pad(a, ((0, 0), (0, h_pad - a.shape[1])))
    return {
        "w1": pad_lane(params["w1"]).astype(jnp.bfloat16),          # (D, 128)
        "b1": pad_lane(params["b1"]),
        "g1": pad_lane(params["g1"]),
        "be1": pad_lane(params["beta1"]),
        "w2": jnp.pad(params["w2"], ((0, dh), (0, dh))).astype(jnp.bfloat16),  # (128, 128)
        "b2": pad_lane(params["b2"]),
        "g2": pad_lane(params["g2"]),
        "be2": pad_lane(params["beta2"]),
        "wo": pad_lane(params["wo"].T).astype(jnp.bfloat16),        # (1, 128) row
        "bo": params["bo"].astype(jnp.float32),                     # (1, 1)
    }


def _plan_tiles(batch, block_rows=None, cap=4096):
    """Rows per grid step and the (possibly padded) batch size."""
    bt = block_rows if block_rows is not None else min(batch, cap)
    b_pad = -(-batch // bt) * bt
    if b_pad > bt:  # multi-tile: aligned stash slices + lane-dense output blocks
        assert bt % 128 == 0, "multi-tile runs need block_rows % 128 == 0"
    return bt, b_pad


def binary_classification_forward(x, prepped, block_rows=None, tile_cap=4096):
    """x: (B, D) f32.  prepped: output of prepare_params().  Returns (B, 1) f32."""
    B, D = x.shape
    H = prepped["w1"].shape[1]                          # 128
    bt, b_pad = _plan_tiles(B, block_rows, tile_cap)
    nbt = b_pad // bt
    if b_pad != B:
        x = jnp.pad(x, ((0, b_pad - B), (0, 0)))        # zero rows, masked from stats
    valid_rows = B if b_pad != B else None

    args = (x,
            prepped["w1"], prepped["b1"], prepped["g1"], prepped["be1"],
            prepped["w2"], prepped["b2"], prepped["g2"], prepped["be2"],
            prepped["wo"], prepped["bo"])

    const = lambda p, i: (0, 0)
    # x is only consumed in phase 0; freezing its block index afterwards keeps
    # the x DMA to exactly one pass over the batch.
    x_spec = pl.BlockSpec((bt, D), lambda p, i: (jnp.where(p == 0, i, nbt - 1), 0))
    in_specs = [x_spec] + [pl.BlockSpec(a.shape, const) for a in args[1:]]
    # Lane-packed logits: (1, b_pad) f32, one (1, bt) block per batch tile.
    # The block index is frozen at 0 during the two statistics phases (no
    # garbage writebacks) and only advances in phase 2, which fully overwrites
    # each block exactly once.
    out_specs = pl.BlockSpec((1, bt), lambda p, i: (0, jnp.where(p == 2, i, 0)))

    # VMEM budget: double-buffered x/out blocks + parameter blocks + bf16
    # activation stash + stats scratch + temporary headroom.  Capped at 56 MiB
    # so the compiler keeps headroom on v7x (64 MiB per TensorCore).
    lane = lambda n: -(-n // 128) * 128
    w_bytes = sum(int(a.size) * a.dtype.itemsize for a in args[1:])
    est = (2 * bt * lane(D) * 4          # x blocks (lane-padded, double-buffered)
           + 2 * 8 * bt * 4              # output blocks
           + 2 * w_bytes                 # parameter blocks
           + 2 * b_pad * H * 2           # h1 + h2 bf16 stash
           + 8 * H * 4                   # stats scratch
           + 8 * bt * H * 4)             # f32/bf16 temporaries headroom
    vmem_limit = int(min(max(est, 8 << 20), 56 << 20))
    # TODO(synk): for very large batches (bf16 stash > ~40 MiB) fall back to
    # recomputing h1/h2 per phase instead of stashing them in VMEM.

    out_row = pl.pallas_call(
        functools.partial(_mlp_kernel, inv_batch=1.0 / B,
                          rows_per_tile=bt, valid_rows=valid_rows),
        out_shape=jax.ShapeDtypeStruct((1, b_pad), jnp.float32),
        grid=(3, nbt),
        in_specs=in_specs,
        out_specs=out_specs,
        scratch_shapes=[
            pltpu.VMEM((b_pad, H), jnp.bfloat16),   # h1 stash (post-ReLU)
            pltpu.VMEM((b_pad, H), jnp.bfloat16),   # h2 stash (post-ReLU)
            pltpu.VMEM((8, H), jnp.float32),        # [sum1,sq1,scale1,shift1,sum2,sq2,scale2,shift2]
        ],
        compiler_params=pltpu.CompilerParams(
            # Both axes stay sequential: the phase axis orders the BN statistic
            # passes and the batch axis accumulates into shared VMEM scratch.
            # TODO(synk): v7x megacore would need per-tile partial stats emitted
            # as outputs + a tiny combine pass to mark the batch axis 'parallel'.
            dimension_semantics=("arbitrary", "arbitrary"),
            vmem_limit_bytes=vmem_limit,
        ),
    )(*args)
    return out_row[0, :B].reshape(B, 1)


def _reference(x, p, matmul_dtype=jnp.float32):
    """Pure-JAX reference (optionally bf16 matmul operands to mirror the kernel)."""
    c = lambda a: a.astype(matmul_dtype)
    mm = lambda a, b: jnp.dot(c(a), c(b), preferred_element_type=jnp.float32)
    h = jnp.maximum(mm(x, p["w1"]) + p["b1"], 0.0)
    m = h.mean(0, keepdims=True); v = ((h - m) ** 2).mean(0, keepdims=True)
    h = (h - m) * jax.lax.rsqrt(v + EPS) * p["g1"] + p["beta1"]
    h = jnp.maximum(mm(h, p["w2"]) + p["b2"], 0.0)
    m = h.mean(0, keepdims=True); v = ((h - m) ** 2).mean(0, keepdims=True)
    h = (h - m) * jax.lax.rsqrt(v + EPS) * p["g2"] + p["beta2"]
    return mm(h, p["wo"]) + p["bo"]


if __name__ == "__main__":
    key = jax.random.PRNGKey(0)
    k_x, k_p, k_x2, k_x3 = jax.random.split(key, 4)

    D = 32                                  # X.shape[1] := 32 features
    params = init_params(k_p, D, hidden=100)
    prepped = prepare_params(params)

    # Small single-tile batch.
    B = 8
    x = jax.random.normal(k_x, (B, D), dtype=jnp.float32)
    out = jax.block_until_ready(binary_classification_forward(x, prepped))
    assert out.shape == (B, 1)
    assert bool(jnp.allclose(out, _reference(x, params, jnp.bfloat16),
                             atol=3e-2, rtol=3e-2))
    assert bool(jnp.allclose(out, _reference(x, params, jnp.float32),
                             atol=1e-1, rtol=1e-1))

    # Larger batch: tiled grid, VMEM activation stash, lane-packed output.
    B2 = 2048
    x2 = jax.random.normal(k_x2, (B2, D), dtype=jnp.float32)
    out2 = jax.block_until_ready(
        binary_classification_forward(x2, prepped, block_rows=256))
    assert out2.shape == (B2, 1)
    assert bool(jnp.allclose(out2, _reference(x2, params, jnp.bfloat16),
                             atol=3e-2, rtol=3e-2))

    # Non-divisible batch: row padding + masked BN statistics.
    B3 = 300
    x3 = jax.random.normal(k_x3, (B3, D), dtype=jnp.float32)
    out3 = jax.block_until_ready(
        binary_classification_forward(x3, prepped, block_rows=128))
    assert out3.shape == (B3, 1)
    assert bool(jnp.allclose(out3, _reference(x3, params, jnp.bfloat16),
                             atol=3e-2, rtol=3e-2))

    print("KERNEL_OK")
</pallas_src>

<mosaic_0001>
module attributes {stable_mosaic.version = 11 : i64} {
  func.func @_mlp_kernel(%arg0: i32, %arg1: i32, %arg2: memref<8x32xf32, #tpu.memory_space<vmem>>, %arg3: memref<32x128xbf16, #tpu.memory_space<vmem>>, %arg4: memref<1x128xf32, #tpu.memory_space<vmem>>, %arg5: memref<1x128xf32, #tpu.memory_space<vmem>>, %arg6: memref<1x128xf32, #tpu.memory_space<vmem>>, %arg7: memref<128x128xbf16, #tpu.memory_space<vmem>>, %arg8: memref<1x128xf32, #tpu.memory_space<vmem>>, %arg9: memref<1x128xf32, #tpu.memory_space<vmem>>, %arg10: memref<1x128xf32, #tpu.memory_space<vmem>>, %arg11: memref<1x128xbf16, #tpu.memory_space<vmem>>, %arg12: memref<1x1xf32, #tpu.memory_space<vmem>>, %arg13: memref<1x8xf32, #tpu.memory_space<vmem>>, %arg14: memref<8x128xbf16, #tpu.memory_space<vmem>>, %arg15: memref<8x128xbf16, #tpu.memory_space<vmem>>, %arg16: memref<8x128xf32, #tpu.memory_space<vmem>>) attributes {dimension_semantics = [#tpu.dimension_semantics<arbitrary>, #tpu.dimension_semantics<arbitrary>], iteration_bounds = array<i64: 3, 1>, scalar_prefetch = 0 : i64, scratch_operands = 3 : i64, tpu.core_type = #tpu.core_type<tc>, window_params = [{transform_indices = @transform_0, window_bounds = array<i64: 8, 32>}, {pipeline_mode = #tpu.pipeline_mode<synchronous>, transform_indices = @transform_1, window_bounds = array<i64: 32, 128>}, {pipeline_mode = #tpu.pipeline_mode<synchronous>, transform_indices = @transform_2, window_bounds = array<i64: 1, 128>}, {pipeline_mode = #tpu.pipeline_mode<synchronous>, transform_indices = @transform_3, window_bounds = array<i64: 1, 128>}, {pipeline_mode = #tpu.pipeline_mode<synchronous>, transform_indices = @transform_4, window_bounds = array<i64: 1, 128>}, {pipeline_mode = #tpu.pipeline_mode<synchronous>, transform_indices = @transform_5, window_bounds = array<i64: 128, 128>}, {pipeline_mode = #tpu.pipeline_mode<synchronous>, transform_indices = @transform_6, window_bounds = array<i64: 1, 128>}, {pipeline_mode = #tpu.pipeline_mode<synchronous>, transform_indices = @transform_7, window_bounds = array<i64: 1, 128>}, {pipeline_mode = #tpu.pipeline_mode<synchronous>, transform_indices = @transform_8, window_bounds = array<i64: 1, 128>}, {pipeline_mode = #tpu.pipeline_mode<synchronous>, transform_indices = @transform_9, window_bounds = array<i64: 1, 128>}, {pipeline_mode = #tpu.pipeline_mode<synchronous>, transform_indices = @transform_10, window_bounds = array<i64: 1, 1>}, {transform_indices = @transform_11, window_bounds = array<i64: 1, 8>}]} {
    %c8_i32 = arith.constant 8 : i32
    %0 = arith.muli %arg1, %c8_i32 : i32
    %c0_i32 = arith.constant 0 : i32
    %1 = arith.cmpi eq, %arg0, %c0_i32 : i32
    %2 = arith.extui %1 : i1 to i32
    %c0_i32_0 = arith.constant 0 : i32
    %3 = arith.cmpi ne, %2, %c0_i32_0 : i32
    scf.if %3 {
      %c0_i32_3 = arith.constant 0 : i32
      %10 = arith.cmpi eq, %arg1, %c0_i32_3 : i32
      %11 = arith.extui %10 : i1 to i32
      %c0_i32_4 = arith.constant 0 : i32
      %12 = arith.cmpi ne, %11, %c0_i32_4 : i32
      scf.if %12 {
        %cst_20 = arith.constant 0.000000e+00 : f32
        %37 = vector.broadcast %cst_20 : f32 to vector<8x128xf32>
        %c0_21 = arith.constant 0 : index
        %c0_22 = arith.constant 0 : index
        %38 = vector.load %arg16[%c0_21, %c0_22] : memref<8x128xf32, #tpu.memory_space<vmem>>, vector<8x128xf32>
        tpu.vector_store %arg16[%c0_21, %c0_22], %37 {strides = array<i32>} : memref<8x128xf32, #tpu.memory_space<vmem>>, vector<8x128xf32>,
      } else {
      }
      %c0 = arith.constant 0 : index
      %c0_5 = arith.constant 0 : index
      %13 = vector.load %arg2[%c0, %c0_5] : memref<8x32xf32, #tpu.memory_space<vmem>>, vector<8x32xf32>
      %14 = arith.truncf %13 : vector<8x32xf32> to vector<8x32xbf16>
      %c0_6 = arith.constant 0 : index
      %c0_7 = arith.constant 0 : index
      %15 = vector.load %arg3[%c0_6, %c0_7] : memref<32x128xbf16, #tpu.memory_space<vmem>>, vector<32x128xbf16>
      %cst = arith.constant dense<0.000000e+00> : vector<8x128xf32>
      %16 = tpu.matmul %14, %15, %cst {dimension_numbers = #tpu.dot_dimension_numbers<[1], [0], [0], [1], [0, 0, 1, 1], [], []>} : vector<8x32xbf16>, vector<32x128xbf16>, vector<8x128xf32> -> vector<8x128xf32>
      %c0_8 = arith.constant 0 : index
      %c0_9 = arith.constant 0 : index
      %17 = vector.load %arg4[%c0_8, %c0_9] : memref<1x128xf32, #tpu.memory_space<vmem>>, vector<1x128xf32>
      %18 = vector.broadcast %17 : vector<1x128xf32> to vector<8x128xf32>
      %19 = arith.addf %16, %18 : vector<8x128xf32>
      %cst_10 = arith.constant 0.000000e+00 : f32
      %20 = vector.broadcast %cst_10 : f32 to vector<8x128xf32>
      %21 = arith.maximumf %19, %20 : vector<8x128xf32>
      %22 = arith.truncf %21 : vector<8x128xf32> to vector<8x128xbf16>
      %23 = arith.index_cast %0 : i32 to index
      %c0_11 = arith.constant 0 : index
      %24 = vector.load %arg14[%23, %c0_11] : memref<8x128xbf16, #tpu.memory_space<vmem>>, vector<8x128xbf16>
      tpu.vector_store %arg14[%23, %c0_11], %22 {strides = array<i32>} : memref<8x128xbf16, #tpu.memory_space<vmem>>, vector<8x128xbf16>,
      %c0_12 = arith.constant 0 : index
      %c0_13 = arith.constant 0 : index
      %25 = vector.load %arg16[%c0_12, %c0_13] : memref<8x128xf32, #tpu.memory_space<vmem>>, vector<2x128xf32>
      %cst_14 = arith.constant dense<0.000000e+00> : vector<128xf32>
      %26 = vector.multi_reduction <add>, %21, %cst_14 [0] : vector<8x128xf32> to vector<128xf32>
      %27 = vector.shape_cast %26 : vector<128xf32> to vector<1x128xf32>
      %28 = arith.mulf %21, %21 : vector<8x128xf32>
      %cst_15 = arith.constant dense<0.000000e+00> : vector<128xf32>
      %29 = vector.multi_reduction <add>, %28, %cst_15 [0] : vector<8x128xf32> to vector<128xf32>
      %30 = vector.shape_cast %29 : vector<128xf32> to vector<1x128xf32>
      %31 = tpu.concatenate %27, %30 in 0 : vector<1x128xf32>, vector<1x128xf32> -> vector<2x128xf32>
      %32 = arith.addf %25, %31 : vector<2x128xf32>
      %c0_16 = arith.constant 0 : index
      %c0_17 = arith.constant 0 : index
      %33 = vector.load %arg16[%c0_16, %c0_17] : memref<8x128xf32, #tpu.memory_space<vmem>>, vector<2x128xf32>
      tpu.vector_store %arg16[%c0_16, %c0_17], %32 {strides = array<i32>} : memref<8x128xf32, #tpu.memory_space<vmem>>, vector<2x128xf32>,
      %c0_i32_18 = arith.constant 0 : i32
      %34 = arith.cmpi eq, %arg1, %c0_i32_18 : i32
      %35 = arith.extui %34 : i1 to i32
      %c0_i32_19 = arith.constant 0 : i32
      %36 = arith.cmpi ne, %35, %c0_i32_19 : i32
      scf.if %36 {
        %c0_20 = arith.constant 0 : index
        %c0_21 = arith.constant 0 : index
        %37 = vector.load %arg16[%c0_20, %c0_21] : memref<8x128xf32, #tpu.memory_space<vmem>>, vector<2x128xf32>
        %38 = vector.extract_strided_slice %37 {offsets = [0, 0], sizes = [1, 128], strides = [1, 1]} : vector<2x128xf32> to vector<1x128xf32>
        %cst_22 = arith.constant 1.250000e-01 : f32
        %39 = vector.broadcast %cst_22 : f32 to vector<1x128xf32>
        %40 = arith.mulf %38, %39 : vector<1x128xf32>
        %41 = vector.extract_strided_slice %37 {offsets = [1, 0], sizes = [1, 128], strides = [1, 1]} : vector<2x128xf32> to vector<1x128xf32>
        %cst_23 = arith.constant 1.250000e-01 : f32
        %42 = vector.broadcast %cst_23 : f32 to vector<1x128xf32>
        %43 = arith.mulf %41, %42 : vector<1x128xf32>
        %44 = arith.mulf %40, %40 : vector<1x128xf32>
        %45 = arith.subf %43, %44 : vector<1x128xf32>
        %cst_24 = arith.constant 0.000000e+00 : f32
        %46 = vector.broadcast %cst_24 : f32 to vector<1x128xf32>
        %47 = arith.maximumf %45, %46 : vector<1x128xf32>
        %c0_25 = arith.constant 0 : index
        %c0_26 = arith.constant 0 : index
        %48 = vector.load %arg5[%c0_25, %c0_26] : memref<1x128xf32, #tpu.memory_space<vmem>>, vector<1x128xf32>
        %cst_27 = arith.constant 9.99999974E-6 : f32
        %49 = vector.broadcast %cst_27 : f32 to vector<1x128xf32>
        %50 = arith.addf %47, %49 : vector<1x128xf32>
        %51 = math.rsqrt %50 : vector<1x128xf32>
        %52 = arith.mulf %48, %51 : vector<1x128xf32>
        %c0_28 = arith.constant 0 : index
        %c0_29 = arith.constant 0 : index
        %53 = vector.load %arg6[%c0_28, %c0_29] : memref<1x128xf32, #tpu.memory_space<vmem>>, vector<1x128xf32>
        %54 = arith.mulf %40, %52 : vector<1x128xf32>
        %55 = arith.subf %53, %54 : vector<1x128xf32>
        %56 = tpu.concatenate %52, %55 in 0 : vector<1x128xf32>, vector<1x128xf32> -> vector<2x128xf32>
        %c2 = arith.constant 2 : index
        %c0_30 = arith.constant 0 : index
        %57 = vector.load %arg16[%c2, %c0_30] : memref<8x128xf32, #tpu.memory_space<vmem>>, vector<2x128xf32>
        tpu.vector_store %arg16[%c2, %c0_30], %56 {strides = array<i32>} : memref<8x128xf32, #tpu.memory_space<vmem>>, vector<2x128xf32>,
      } else {
      }
    } else {
    }
    %c1_i32 = arith.constant 1 : i32
    %4 = arith.cmpi eq, %arg0, %c1_i32 : i32
    %5 = arith.extui %4 : i1 to i32
    %c0_i32_1 = arith.constant 0 : i32
    %6 = arith.cmpi ne, %5, %c0_i32_1 : i32
    scf.if %6 {
      %c2 = arith.constant 2 : index
      %c0 = arith.constant 0 : index
      %10 = vector.load %arg16[%c2, %c0] : memref<8x128xf32, #tpu.memory_space<vmem>>, vector<2x128xf32>
      %11 = arith.index_cast %0 : i32 to index
      %c0_3 = arith.constant 0 : index
      %12 = vector.load %arg14[%11, %c0_3] : memref<8x128xbf16, #tpu.memory_space<vmem>>, vector<8x128xbf16>
      %13 = arith.extf %12 : vector<8x128xbf16> to vector<8x128xf32>
      %14 = vector.extract_strided_slice %10 {offsets = [0, 0], sizes = [1, 128], strides = [1, 1]} : vector<2x128xf32> to vector<1x128xf32>
      %15 = vector.broadcast %14 : vector<1x128xf32> to vector<8x128xf32>
      %16 = arith.mulf %13, %15 : vector<8x128xf32>
      %17 = vector.extract_strided_slice %10 {offsets = [1, 0], sizes = [1, 128], strides = [1, 1]} : vector<2x128xf32> to vector<1x128xf32>
      %18 = vector.broadcast %17 : vector<1x128xf32> to vector<8x128xf32>
      %19 = arith.addf %16, %18 : vector<8x128xf32>
      %20 = arith.truncf %19 : vector<8x128xf32> to vector<8x128xbf16>
      %c0_4 = arith.constant 0 : index
      %c0_5 = arith.constant 0 : index
      %21 = vector.load %arg7[%c0_4, %c0_5] : memref<128x128xbf16, #tpu.memory_space<vmem>>, vector<128x128xbf16>
      %cst = arith.constant dense<0.000000e+00> : vector<8x128xf32>
      %22 = tpu.matmul %20, %21, %cst {dimension_numbers = #tpu.dot_dimension_numbers<[1], [0], [0], [1], [0, 0, 1, 1], [], []>} : vector<8x128xbf16>, vector<128x128xbf16>, vector<8x128xf32> -> vector<8x128xf32>
      %c0_6 = arith.constant 0 : index
      %c0_7 = arith.constant 0 : index
      %23 = vector.load %arg8[%c0_6, %c0_7] : memref<1x128xf32, #tpu.memory_space<vmem>>, vector<1x128xf32>
      %24 = vector.broadcast %23 : vector<1x128xf32> to vector<8x128xf32>
      %25 = arith.addf %22, %24 : vector<8x128xf32>
      %cst_8 = arith.constant 0.000000e+00 : f32
      %26 = vector.broadcast %cst_8 : f32 to vector<8x128xf32>
      %27 = arith.maximumf %25, %26 : vector<8x128xf32>
      %28 = arith.truncf %27 : vector<8x128xf32> to vector<8x128xbf16>
      %29 = arith.index_cast %0 : i32 to index
      %c0_9 = arith.constant 0 : index
      %30 = vector.load %arg15[%29, %c0_9] : memref<8x128xbf16, #tpu.memory_space<vmem>>, vector<8x128xbf16>
      tpu.vector_store %arg15[%29, %c0_9], %28 {strides = array<i32>} : memref<8x128xbf16, #tpu.memory_space<vmem>>, vector<8x128xbf16>,
      %c4 = arith.constant 4 : index
      %c0_10 = arith.constant 0 : index
      %31 = vector.load %arg16[%c4, %c0_10] : memref<8x128xf32, #tpu.memory_space<vmem>>, vector<2x128xf32>
      %cst_11 = arith.constant dense<0.000000e+00> : vector<128xf32>
      %32 = vector.multi_reduction <add>, %27, %cst_11 [0] : vector<8x128xf32> to vector<128xf32>
      %33 = vector.shape_cast %32 : vector<128xf32> to vector<1x128xf32>
      %34 = arith.mulf %27, %27 : vector<8x128xf32>
      %cst_12 = arith.constant dense<0.000000e+00> : vector<128xf32>
      %35 = vector.multi_reduction <add>, %34, %cst_12 [0] : vector<8x128xf32> to vector<128xf32>
      %36 = vector.shape_cast %35 : vector<128xf32> to vector<1x128xf32>
      %37 = tpu.concatenate %33, %36 in 0 : vector<1x128xf32>, vector<1x128xf32> -> vector<2x128xf32>
      %38 = arith.addf %31, %37 : vector<2x128xf32>
      %c4_13 = arith.constant 4 : index
      %c0_14 = arith.constant 0 : index
      %39 = vector.load %arg16[%c4_13, %c0_14] : memref<8x128xf32, #tpu.memory_space<vmem>>, vector<2x128xf32>
      tpu.vector_store %arg16[%c4_13, %c0_14], %38 {strides = array<i32>} : memref<8x128xf32, #tpu.memory_space<vmem>>, vector<2x128xf32>,
      %c0_i32_15 = arith.constant 0 : i32
      %40 = arith.cmpi eq, %arg1, %c0_i32_15 : i32
      %41 = arith.extui %40 : i1 to i32
      %c0_i32_16 = arith.constant 0 : i32
      %42 = arith.cmpi ne, %41, %c0_i32_16 : i32
      scf.if %42 {
        %c4_17 = arith.constant 4 : index
        %c0_18 = arith.constant 0 : index
        %43 = vector.load %arg16[%c4_17, %c0_18] : memref<8x128xf32, #tpu.memory_space<vmem>>, vector<2x128xf32>
        %44 = vector.extract_strided_slice %43 {offsets = [0, 0], sizes = [1, 128], strides = [1, 1]} : vector<2x128xf32> to vector<1x128xf32>
        %cst_19 = arith.constant 1.250000e-01 : f32
        %45 = vector.broadcast %cst_19 : f32 to vector<1x128xf32>
        %46 = arith.mulf %44, %45 : vector<1x128xf32>
        %47 = vector.extract_strided_slice %43 {offsets = [1, 0], sizes = [1, 128], strides = [1, 1]} : vector<2x128xf32> to vector<1x128xf32>
        %cst_20 = arith.constant 1.250000e-01 : f32
        %48 = vector.broadcast %cst_20 : f32 to vector<1x128xf32>
        %49 = arith.mulf %47, %48 : vector<1x128xf32>
        %50 = arith.mulf %46, %46 : vector<1x128xf32>
        %51 = arith.subf %49, %50 : vector<1x128xf32>
        %cst_21 = arith.constant 0.000000e+00 : f32
        %52 = vector.broadcast %cst_21 : f32 to vector<1x128xf32>
        %53 = arith.maximumf %51, %52 : vector<1x128xf32>
        %c0_22 = arith.constant 0 : index
        %c0_23 = arith.constant 0 : index
        %54 = vector.load %arg9[%c0_22, %c0_23] : memref<1x128xf32, #tpu.memory_space<vmem>>, vector<1x128xf32>
        %cst_24 = arith.constant 9.99999974E-6 : f32
        %55 = vector.broadcast %cst_24 : f32 to vector<1x128xf32>
        %56 = arith.addf %53, %55 : vector<1x128xf32>
        %57 = math.rsqrt %56 : vector<1x128xf32>
        %58 = arith.mulf %54, %57 : vector<1x128xf32>
        %c0_25 = arith.constant 0 : index
        %c0_26 = arith.constant 0 : index
        %59 = vector.load %arg10[%c0_25, %c0_26] : memref<1x128xf32, #tpu.memory_space<vmem>>, vector<1x128xf32>
        %60 = arith.mulf %46, %58 : vector<1x128xf32>
        %61 = arith.subf %59, %60 : vector<1x128xf32>
        %62 = tpu.concatenate %58, %61 in 0 : vector<1x128xf32>, vector<1x128xf32> -> vector<2x128xf32>
        %c6 = arith.constant 6 : index
        %c0_27 = arith.constant 0 : index
        %63 = vector.load %arg16[%c6, %c0_27] : memref<8x128xf32, #tpu.memory_space<vmem>>, vector<2x128xf32>
        tpu.vector_store %arg16[%c6, %c0_27], %62 {strides = array<i32>} : memref<8x128xf32, #tpu.memory_space<vmem>>, vector<2x128xf32>,
      } else {
      }
    } else {
    }
    %c2_i32 = arith.constant 2 : i32
    %7 = arith.cmpi eq, %arg0, %c2_i32 : i32
    %8 = arith.extui %7 : i1 to i32
    %c0_i32_2 = arith.constant 0 : i32
    %9 = arith.cmpi ne, %8, %c0_i32_2 : i32
    scf.if %9 {
      %c6 = arith.constant 6 : index
      %c0 = arith.constant 0 : index
      %10 = vector.load %arg16[%c6, %c0] : memref<8x128xf32, #tpu.memory_space<vmem>>, vector<2x128xf32>
      %11 = arith.index_cast %0 : i32 to index
      %c0_3 = arith.constant 0 : index
      %12 = vector.load %arg15[%11, %c0_3] : memref<8x128xbf16, #tpu.memory_space<vmem>>, vector<8x128xbf16>
      %13 = arith.extf %12 : vector<8x128xbf16> to vector<8x128xf32>
      %14 = vector.extract_strided_slice %10 {offsets = [0, 0], sizes = [1, 128], strides = [1, 1]} : vector<2x128xf32> to vector<1x128xf32>
      %15 = vector.broadcast %14 : vector<1x128xf32> to vector<8x128xf32>
      %16 = arith.mulf %13, %15 : vector<8x128xf32>
      %17 = vector.extract_strided_slice %10 {offsets = [1, 0], sizes = [1, 128], strides = [1, 1]} : vector<2x128xf32> to vector<1x128xf32>
      %18 = vector.broadcast %17 : vector<1x128xf32> to vector<8x128xf32>
      %19 = arith.addf %16, %18 : vector<8x128xf32>
      %c0_4 = arith.constant 0 : index
      %c0_5 = arith.constant 0 : index
      %20 = vector.load %arg11[%c0_4, %c0_5] : memref<1x128xbf16, #tpu.memory_space<vmem>>, vector<1x128xbf16>
      %21 = arith.truncf %19 : vector<8x128xf32> to vector<8x128xbf16>
      %cst = arith.constant dense<0.000000e+00> : vector<1x8xf32>
      %22 = tpu.matmul %20, %21, %cst {dimension_numbers = #tpu.dot_dimension_numbers<[1], [1], [0], [0], [0, 0, 1, 0], [], []>} : vector<1x128xbf16>, vector<8x128xbf16>, vector<1x8xf32> -> vector<1x8xf32>
      %c0_6 = arith.constant 0 : index
      %c0_7 = arith.constant 0 : index
      %23 = vector.load %arg12[%c0_6, %c0_7] : memref<1x1xf32, #tpu.memory_space<vmem>>, vector<1x1xf32>
      %24 = vector.broadcast %23 : vector<1x1xf32> to vector<1x8xf32>
      %25 = arith.addf %22, %24 : vector<1x8xf32>
      %c0_8 = arith.constant 0 : index
      %c0_9 = arith.constant 0 : index
      %26 = vector.load %arg13[%c0_8, %c0_9] : memref<1x8xf32, #tpu.memory_space<vmem>>, vector<1x8xf32>
      tpu.vector_store %arg13[%c0_8, %c0_9], %25 {strides = array<i32>} : memref<1x8xf32, #tpu.memory_space<vmem>>, vector<1x8xf32>,
    } else {
    }
    return
  }
  func.func @transform_0(%arg0: i32, %arg1: i32) -> (i32, i32) {
    %c0_i32 = arith.constant 0 : i32
    %0 = arith.cmpi eq, %arg0, %c0_i32 : i32
    %c0_i32_0 = arith.constant 0 : i32
    %1 = arith.select %0, %arg1, %c0_i32_0 : i32
    %c0_i32_1 = arith.constant 0 : i32
    %c0_i32_2 = arith.constant 0 : i32
    return %1, %c0_i32_1 : i32, i32
  }
  func.func @transform_1(%arg0: i32, %arg1: i32) -> (i32, i32) {
    %c0_i32 = arith.constant 0 : i32
    %c0_i32_0 = arith.constant 0 : i32
    %c0_i32_1 = arith.constant 0 : i32
    return %c0_i32, %c0_i32_0 : i32, i32
  }
  func.func @transform_2(%arg0: i32, %arg1: i32) -> (i32, i32) {
    %c0_i32 = arith.constant 0 : i32
    %c0_i32_0 = arith.constant 0 : i32
    %c0_i32_1 = arith.constant 0 : i32
    return %c0_i32, %c0_i32_0 : i32, i32
  }
  func.func @transform_3(%arg0: i32, %arg1: i32) -> (i32, i32) {
    %c0_i32 = arith.constant 0 : i32
    %c0_i32_0 = arith.constant 0 : i32
    %c0_i32_1 = arith.constant 0 : i32
    return %c0_i32, %c0_i32_0 : i32, i32
  }
  func.func @transform_4(%arg0: i32, %arg1: i32) -> (i32, i32) {
    %c0_i32 = arith.constant 0 : i32
    %c0_i32_0 = arith.constant 0 : i32
    %c0_i32_1 = arith.constant 0 : i32
    return %c0_i32, %c0_i32_0 : i32, i32
  }
  func.func @transform_5(%arg0: i32, %arg1: i32) -> (i32, i32) {
    %c0_i32 = arith.constant 0 : i32
    %c0_i32_0 = arith.constant 0 : i32
    %c0_i32_1 = arith.constant 0 : i32
    return %c0_i32, %c0_i32_0 : i32, i32
  }
  func.func @transform_6(%arg0: i32, %arg1: i32) -> (i32, i32) {
    %c0_i32 = arith.constant 0 : i32
    %c0_i32_0 = arith.constant 0 : i32
    %c0_i32_1 = arith.constant 0 : i32
    return %c0_i32, %c0_i32_0 : i32, i32
  }
  func.func @transform_7(%arg0: i32, %arg1: i32) -> (i32, i32) {
    %c0_i32 = arith.constant 0 : i32
    %c0_i32_0 = arith.constant 0 : i32
    %c0_i32_1 = arith.constant 0 : i32
    return %c0_i32, %c0_i32_0 : i32, i32
  }
  func.func @transform_8(%arg0: i32, %arg1: i32) -> (i32, i32) {
    %c0_i32 = arith.constant 0 : i32
    %c0_i32_0 = arith.constant 0 : i32
    %c0_i32_1 = arith.constant 0 : i32
    return %c0_i32, %c0_i32_0 : i32, i32
  }
  func.func @transform_9(%arg0: i32, %arg1: i32) -> (i32, i32) {
    %c0_i32 = arith.constant 0 : i32
    %c0_i32_0 = arith.constant 0 : i32
    %c0_i32_1 = arith.constant 0 : i32
    return %c0_i32, %c0_i32_0 : i32, i32
  }
  func.func @transform_10(%arg0: i32, %arg1: i32) -> (i32, i32) {
    %c0_i32 = arith.constant 0 : i32
    %c0_i32_0 = arith.constant 0 : i32
    %c0_i32_1 = arith.constant 0 : i32
    return %c0_i32, %c0_i32_0 : i32, i32
  }
  func.func @transform_11(%arg0: i32, %arg1: i32) -> (i32, i32) {
    %c2_i32 = arith.constant 2 : i32
    %0 = arith.cmpi eq, %arg0, %c2_i32 : i32
    %c0_i32 = arith.constant 0 : i32
    %1 = arith.select %0, %arg1, %c0_i32 : i32
    %c0_i32_0 = arith.constant 0 : i32
    %c0_i32_1 = arith.constant 0 : i32
    return %c0_i32_0, %1 : i32, i32
  }
}

</mosaic_0001>

<llo_original>
// kernel: tpu_custom_call.1
$region0: #{tpu_custom_call.1}
  #allocation0 [shape = 'u32[]', space=smem, size = 0x4, offset = 0x4, fixed_abs, tag = 'smem constant byte address 0x4 - core index']
  #allocation1 [shape = 'u32[144,128]{1,0:T(1,128)}', space=vmem, size = 0x12000, scoped, tag = 'internal scratch']
  #allocation2 [shape = 'bf16[8,128]{1,0:T(8,128)(2,1)}', space=vmem, size = 0x800, scoped, tag = 'scratch operand']
  #allocation3 [shape = 'bf16[8,128]{1,0:T(8,128)(2,1)}', space=vmem, size = 0x800, scoped, tag = 'scratch operand']
  #allocation4 [shape = 'f32[8,128]{1,0:T(8,128)}', space=vmem, size = 0x1000, scoped, tag = 'scratch operand']
  #allocation5 [shape = 'f32[1,1]{1,0:T(1,128)S(1)}', space=vmem, size = 0x200, scoped, tag = 'scoped memory for tpu_custom_call.1']
  %s0 = inlined_call_operand.hbm [shape: f32[8,32], index: 0, kind: input, shape index: {}]
  %s1 = inlined_call_operand.hbm [shape: bf16[32,128], index: 1, kind: input, shape index: {}]
  %s2 = inlined_call_operand.vmem [shape: f32[1,128], index: 2, kind: input, shape index: {}]
  %s3 = inlined_call_operand.vmem [shape: f32[1,128], index: 3, kind: input, shape index: {}]
  %s4 = inlined_call_operand.vmem [shape: f32[1,128], index: 4, kind: input, shape index: {}]
  %s5 = inlined_call_operand.hbm [shape: bf16[128,128], index: 5, kind: input, shape index: {}]
  %s6 = inlined_call_operand.vmem [shape: f32[1,128], index: 6, kind: input, shape index: {}]
  %s7 = inlined_call_operand.vmem [shape: f32[1,128], index: 7, kind: input, shape index: {}]
  %s8 = inlined_call_operand.vmem [shape: f32[1,128], index: 8, kind: input, shape index: {}]
  %s9 = inlined_call_operand.vmem [shape: bf16[1,128], index: 9, kind: input, shape index: {}]
  %s10 = inlined_call_operand.<no memory space> [shape: f32[1,1], index: 10, kind: input, shape index: {}]
  %s11 = inlined_call_operand.hbm [shape: f32[1,8], index: 11, kind: output, shape index: {}]
  %s12 = sld [smem:[#allocation0]]
  $region113: #{tpu_custom_call.1} parent=0
    _
  %s14 = ssub.s32 1, %s12
  %s15 = scalar_select 0, %s14, %s12
  %v16 = vstv %s10
  %17 = vst [vmem:[#allocation5] sm:$0x1] %v16
  $region1: #{tpu_custom_call.1} parent=0
    #allocation6 [shape = 'u8[8192]{0}', space=vmem, size = 0x2000, scoped, tag = 'input window, operand 0']
    #allocation7 [shape = 's32[2]{0}', space=sflag, size = 0x8, scoped, tag = 'scoped memory for tpu_custom_call.1']
    #allocation8 [shape = 's32[2]{0}', space=sflag, size = 0x8, scoped, tag = 'scoped memory for tpu_custom_call.1']
    #allocation9 [shape = 'u8[8192]{0}', space=vmem, size = 0x2000, scoped, tag = 'input window, operand 1, single buffered']
    #allocation10 [shape = 's32[1]{0}', space=sflag, size = 0x4, scoped, tag = 'scoped memory for tpu_custom_call.1']
    #allocation11 [shape = 'u8[32768]{0}', space=vmem, size = 0x8000, scoped, tag = 'input window, operand 5, single buffered']
    #allocation12 [shape = 'u8[1024]{0}', space=vmem, size = 0x400, scoped, tag = 'output window, operand 0']
    %18 = vsyncpa [#allocation7], 0
    %s19 = scalar_lea.sflag [#allocation7], 1
    %20 = vsyncpa %s19, 0
    %21 = vsyncpa [#allocation10], 0
    %22 = vsyncpa [#allocation8], 0
    %s23 = scalar_lea.sflag [#allocation8], 1
    %24 = vsyncpa %s23, 0
    loop: start=0, step=1, limit=5
    $region2: #{tpu_custom_call.1} parent=1 // loop_pre_header
      _
    $region3: #{tpu_custom_call.1} parent=1 // loop_header
      %s26 = sphi 0, %s30
      %p27 = scmp.ge.s32.totalorder %s26, 5
      %s33 = sphi 0, %s45
      %s34 = sphi 0, %s41
      %s35 = sphi 0, %s33
      %s36 = sphi 0, %s34
      %s37 = sphi 0, %s35
      %s38 = sphi 0, %s36
      %s52 = sphi 0, %s54
      %s55 = sphi 0, %s52
      %s56 = sphi 0, %s55
      %s72 = sphi 0, %s56
      %s76 = sphi 0, %s76
      %s78 = sphi 0, %s76
      %s79 = sphi 0, %s78
      %s93 = sphi 0, %s79
      %s97 = sphi 0, %s97
      %s99 = sphi 0, %s97
      %s100 = sphi 0, %s99
      %s114 = sphi 0, %s100
      %s118 = sphi 0, %s118
      %s120 = sphi 0, %s118
      %s121 = sphi 0, %s120
      %s135 = sphi 0, %s121
      %s139 = sphi 0, %s139
      %s141 = sphi 0, %s139
      %s142 = sphi 0, %s141
      %s156 = sphi 0, %s142
      %s160 = sphi 0, %s160
      %s162 = sphi 0, %s160
      %s163 = sphi 0, %s162
      %s177 = sphi 0, %s163
      %s181 = sphi 0, %s181
      %s183 = sphi 0, %s181
      %s184 = sphi 0, %s183
      %s198 = sphi 0, %s184
      %s202 = sphi 0, %s202
      %s204 = sphi 0, %s202
      %s205 = sphi 0, %s204
      %s219 = sphi 0, %s205
      %s223 = sphi 0, %s223
      %s225 = sphi 0, %s223
      %s226 = sphi 0, %s225
      %s240 = sphi 0, %s226
      %s244 = sphi 0, %s244
      %s246 = sphi 0, %s244
      %s247 = sphi 0, %s246
      %s261 = sphi 0, %s247
      %s265 = sphi 0, %s265
      %s267 = sphi 0, %s265
      %s268 = sphi 0, %s267
      %s282 = sphi 0, %s268
      %s292 = sphi 0, %s294
      %s295 = sphi 0, %s292
      %s296 = sphi 0, %s295
      %s312 = sphi 0, %s296
    $region4: #{tpu_custom_call.1} parent=1 // loop_header_branch
      %29 = sbr.rel (%p27) target = $region8
    $region5: #{tpu_custom_call.1} parent=1 // loop_body
      %s31 = ssub.s32 %s26, 1
      %s32 = ssub.s32 %s26, 2
      %s39 = sadd.s32 1, %s34
      %p40 = scmp.ge.s32.totalorder %s39, 1
      %s41 = scalar_select %p40, 0, %s39
      %s42 = sadd.s32 1, %s33
      %s43 = scalar_select %p40, %s42, %s33
      %p44 = scmp.ge.s32.totalorder %s43, 3
      %s45 = scalar_select %p44, 0, %s43
      %p46 = scmp.eq.s32.totalorder %s33, 0
      %s47 = scalar_select %p46, %s34, 0
      %p48 = scmp.eq.s32.totalorder %s45, 0
      %s49 = scalar_select %p48, %s41, 0
      %s50 = ssub.s32 %s47, %s49
      %p51 = scmp.eq.s32.totalorder %s50, 0
      %s53 = sadd.s32 %s52, 1
      %s54 = scalar_select %p51, %s52, %s53
      %p57 = pneg %p51
      %p58 = scmp.eq.s32.totalorder %s26, 2
      %p59 = por %p57, %p58
      %p60 = scmp.ne.s32.totalorder %s52, %s55
      %p61 = scmp.eq.s32.totalorder %s26, 0
      %p62 = por %p60, %p61
      %p63 = scmp.ne.s32.totalorder %s52, %s55
      %p64 = scmp.eq.s32.totalorder %s31, 2
      %p65 = por %p63, %p64
      %p66 = scmp.ne.s32.totalorder %s55, %s56
      %p67 = scmp.eq.s32.totalorder %s31, 0
      %p68 = por %p66, %p67
      %p69 = scmp.ne.s32.totalorder %s55, %s56
      %p70 = scmp.eq.s32.totalorder %s32, 2
      %p71 = por %p69, %p70
      %p73 = scmp.ne.s32.totalorder %s56, %s72
      %p74 = scmp.eq.s32.totalorder %s32, 0
      %p75 = por %p73, %p74
      %s77 = sadd.s32 %s76, 1
      %p80 = scmp.eq.s32.totalorder %s26, 2
      %p81 = scmp.ne.s32.totalorder %s76, %s78
      %p82 = scmp.eq.s32.totalorder %s26, 0
      %p83 = por %p81, %p82
      %p84 = scmp.ne.s32.totalorder %s76, %s78
      %p85 = scmp.eq.s32.totalorder %s31, 2
      %p86 = por %p84, %p85
      %p87 = scmp.ne.s32.totalorder %s78, %s79
      %p88 = scmp.eq.s32.totalorder %s31, 0
      %p89 = por %p87, %p88
      %p90 = scmp.ne.s32.totalorder %s78, %s79
      %p91 = scmp.eq.s32.totalorder %s32, 2
      %p92 = por %p90, %p91
      %p94 = scmp.ne.s32.totalorder %s79, %s93
      %p95 = scmp.eq.s32.totalorder %s32, 0
      %p96 = por %p94, %p95
      %s98 = sadd.s32 %s97, 1
      %p101 = scmp.eq.s32.totalorder %s26, 2
      %p102 = scmp.ne.s32.totalorder %s97, %s99
      %p103 = scmp.eq.s32.totalorder %s26, 0
      %p104 = por %p102, %p103
      %p105 = scmp.ne.s32.totalorder %s97, %s99
      %p106 = scmp.eq.s32.totalorder %s31, 2
      %p107 = por %p105, %p106
      %p108 = scmp.ne.s32.totalorder %s99, %s100
      %p109 = scmp.eq.s32.totalorder %s31, 0
      %p110 = por %p108, %p109
      %p111 = scmp.ne.s32.totalorder %s99, %s100
      %p112 = scmp.eq.s32.totalorder %s32, 2
      %p113 = por %p111, %p112
      %p115 = scmp.ne.s32.totalorder %s100, %s114
      %p116 = scmp.eq.s32.totalorder %s32, 0
      %p117 = por %p115, %p116
      %s119 = sadd.s32 %s118, 1
      %p122 = scmp.eq.s32.totalorder %s26, 2
      %p123 = scmp.ne.s32.totalorder %s118, %s120
      %p124 = scmp.eq.s32.totalorder %s26, 0
      %p125 = por %p123, %p124
      %p126 = scmp.ne.s32.totalorder %s118, %s120
      %p127 = scmp.eq.s32.totalorder %s31, 2
      %p128 = por %p126, %p127
      %p129 = scmp.ne.s32.totalorder %s120, %s121
      %p130 = scmp.eq.s32.totalorder %s31, 0
      %p131 = por %p129, %p130
      %p132 = scmp.ne.s32.totalorder %s120, %s121
      %p133 = scmp.eq.s32.totalorder %s32, 2
      %p134 = por %p132, %p133
      %p136 = scmp.ne.s32.totalorder %s121, %s135
      %p137 = scmp.eq.s32.totalorder %s32, 0
      %p138 = por %p136, %p137
      %s140 = sadd.s32 %s139, 1
      %p143 = scmp.eq.s32.totalorder %s26, 2
      %p144 = scmp.ne.s32.totalorder %s139, %s141
      %p145 = scmp.eq.s32.totalorder %s26, 0
      %p146 = por %p144, %p145
      %p147 = scmp.ne.s32.totalorder %s139, %s141
      %p148 = scmp.eq.s32.totalorder %s31, 2
      %p149 = por %p147, %p148
      %p150 = scmp.ne.s32.totalorder %s141, %s142
      %p151 = scmp.eq.s32.totalorder %s31, 0
      %p152 = por %p150, %p151
      %p153 = scmp.ne.s32.totalorder %s141, %s142
      %p154 = scmp.eq.s32.totalorder %s32, 2
      %p155 = por %p153, %p154
      %p157 = scmp.ne.s32.totalorder %s142, %s156
      %p158 = scmp.eq.s32.totalorder %s32, 0
      %p159 = por %p157, %p158
      %s161 = sadd.s32 %s160, 1
      %p164 = scmp.eq.s32.totalorder %s26, 2
      %p165 = scmp.ne.s32.totalorder %s160, %s162
      %p166 = scmp.eq.s32.totalorder %s26, 0
      %p167 = por %p165, %p166
      %p168 = scmp.ne.s32.totalorder %s160, %s162
      %p169 = scmp.eq.s32.totalorder %s31, 2
      %p170 = por %p168, %p169
      %p171 = scmp.ne.s32.totalorder %s162, %s163
      %p172 = scmp.eq.s32.totalorder %s31, 0
      %p173 = por %p171, %p172
      %p174 = scmp.ne.s32.totalorder %s162, %s163
      %p175 = scmp.eq.s32.totalorder %s32, 2
      %p176 = por %p174, %p175
      %p178 = scmp.ne.s32.totalorder %s163, %s177
      %p179 = scmp.eq.s32.totalorder %s32, 0
      %p180 = por %p178, %p179
      %s182 = sadd.s32 %s181, 1
      %p185 = scmp.eq.s32.totalorder %s26, 2
      %p186 = scmp.ne.s32.totalorder %s181, %s183
      %p187 = scmp.eq.s32.totalorder %s26, 0
      %p188 = por %p186, %p187
      %p189 = scmp.ne.s32.totalorder %s181, %s183
      %p190 = scmp.eq.s32.totalorder %s31, 2
      %p191 = por %p189, %p190
      %p192 = scmp.ne.s32.totalorder %s183, %s184
      %p193 = scmp.eq.s32.totalorder %s31, 0
      %p194 = por %p192, %p193
      %p195 = scmp.ne.s32.totalorder %s183, %s184
      %p196 = scmp.eq.s32.totalorder %s32, 2
      %p197 = por %p195, %p196
      %p199 = scmp.ne.s32.totalorder %s184, %s198
      %p200 = scmp.eq.s32.totalorder %s32, 0
      %p201 = por %p199, %p200
      %s203 = sadd.s32 %s202, 1
      %p206 = scmp.eq.s32.totalorder %s26, 2
      %p207 = scmp.ne.s32.totalorder %s202, %s204
      %p208 = scmp.eq.s32.totalorder %s26, 0
      %p209 = por %p207, %p208
      %p210 = scmp.ne.s32.totalorder %s202, %s204
      %p211 = scmp.eq.s32.totalorder %s31, 2
      %p212 = por %p210, %p211
      %p213 = scmp.ne.s32.totalorder %s204, %s205
      %p214 = scmp.eq.s32.totalorder %s31, 0
      %p215 = por %p213, %p214
      %p216 = scmp.ne.s32.totalorder %s204, %s205
      %p217 = scmp.eq.s32.totalorder %s32, 2
      %p218 = por %p216, %p217
      %p220 = scmp.ne.s32.totalorder %s205, %s219
      %p221 = scmp.eq.s32.totalorder %s32, 0
      %p222 = por %p220, %p221
      %s224 = sadd.s32 %s223, 1
      %p227 = scmp.eq.s32.totalorder %s26, 2
      %p228 = scmp.ne.s32.totalorder %s223, %s225
      %p229 = scmp.eq.s32.totalorder %s26, 0
      %p230 = por %p228, %p229
      %p231 = scmp.ne.s32.totalorder %s223, %s225
      %p232 = scmp.eq.s32.totalorder %s31, 2
      %p233 = por %p231, %p232
      %p234 = scmp.ne.s32.totalorder %s225, %s226
      %p235 = scmp.eq.s32.totalorder %s31, 0
      %p236 = por %p234, %p235
      %p237 = scmp.ne.s32.totalorder %s225, %s226
      %p238 = scmp.eq.s32.totalorder %s32, 2
      %p239 = por %p237, %p238
      %p241 = scmp.ne.s32.totalorder %s226, %s240
      %p242 = scmp.eq.s32.totalorder %s32, 0
      %p243 = por %p241, %p242
      %s245 = sadd.s32 %s244, 1
      %p248 = scmp.eq.s32.totalorder %s26, 2
      %p249 = scmp.ne.s32.totalorder %s244, %s246
      %p250 = scmp.eq.s32.totalorder %s26, 0
      %p251 = por %p249, %p250
      %p252 = scmp.ne.s32.totalorder %s244, %s246
      %p253 = scmp.eq.s32.totalorder %s31, 2
      %p254 = por %p252, %p253
      %p255 = scmp.ne.s32.totalorder %s246, %s247
      %p256 = scmp.eq.s32.totalorder %s31, 0
      %p257 = por %p255, %p256
      %p258 = scmp.ne.s32.totalorder %s246, %s247
      %p259 = scmp.eq.s32.totalorder %s32, 2
      %p260 = por %p258, %p259
      %p262 = scmp.ne.s32.totalorder %s247, %s261
      %p263 = scmp.eq.s32.totalorder %s32, 0
      %p264 = por %p262, %p263
      %s266 = sadd.s32 %s265, 1
      %p269 = scmp.eq.s32.totalorder %s26, 2
      %p270 = scmp.ne.s32.totalorder %s265, %s267
      %p271 = scmp.eq.s32.totalorder %s26, 0
      %p272 = por %p270, %p271
      %p273 = scmp.ne.s32.totalorder %s265, %s267
      %p274 = scmp.eq.s32.totalorder %s31, 2
      %p275 = por %p273, %p274
      %p276 = scmp.ne.s32.totalorder %s267, %s268
      %p277 = scmp.eq.s32.totalorder %s31, 0
      %p278 = por %p276, %p277
      %p279 = scmp.ne.s32.totalorder %s267, %s268
      %p280 = scmp.eq.s32.totalorder %s32, 2
      %p281 = por %p279, %p280
      %p283 = scmp.ne.s32.totalorder %s268, %s282
      %p284 = scmp.eq.s32.totalorder %s32, 0
      %p285 = por %p283, %p284
      %p286 = scmp.eq.s32.totalorder %s33, 2
      %s287 = scalar_select %p286, %s34, 0
      %p288 = scmp.eq.s32.totalorder %s45, 2
      %s289 = scalar_select %p288, %s41, 0
      %s290 = ssub.s32 %s287, %s289
      %p291 = scmp.eq.s32.totalorder %s290, 0
      %s293 = sadd.s32 %s292, 1
      %s294 = scalar_select %p291, %s292, %s293
      %p297 = pneg %p291
      %p298 = scmp.eq.s32.totalorder %s26, 2
      %p299 = por %p297, %p298
      %p300 = scmp.ne.s32.totalorder %s292, %s295
      %p301 = scmp.eq.s32.totalorder %s26, 0
      %p302 = por %p300, %p301
      %p303 = scmp.ne.s32.totalorder %s292, %s295
      %p304 = scmp.eq.s32.totalorder %s31, 2
      %p305 = por %p303, %p304
      %p306 = scmp.ne.s32.totalorder %s295, %s296
      %p307 = scmp.eq.s32.totalorder %s31, 0
      %p308 = por %p306, %p307
      %p309 = scmp.ne.s32.totalorder %s295, %s296
      %p310 = scmp.eq.s32.totalorder %s32, 2
      %p311 = por %p309, %p310
      %p313 = scmp.ne.s32.totalorder %s296, %s312
      %p314 = scmp.eq.s32.totalorder %s32, 0
      %p315 = por %p313, %p314
      %p316 = scmp.le.s32.totalorder 1, %s26
      %p317 = scmp.lt.s32.totalorder %s26, 4
      %p318 = pnand %p316, %p317
      %p319 = pneg %p318
      // Predicated region
      $region9: #{tpu_custom_call.1} parent=5 // pred_check
        _
      $region10: #{tpu_custom_call.1} parent=5 // pred_check_branch
        %321 = sbr.rel (%p318) target = $region12
      $region11: #{tpu_custom_call.1} parent=5 // pred_region
        %s322 = ssub.s32 %s26, 1
        // Predicated region
        $region13: #{tpu_custom_call.1} parent=11 // pred_check
          %p323 = pneg %p89
        $region14: #{tpu_custom_call.1} parent=11 // pred_check_branch
          %325 = sbr.rel (%p323) target = $region16
        $region15: #{tpu_custom_call.1} parent=11 // pred_region
          %s327 = ssub.s32 256, 256
          %328 = vsyncadd [#allocation10], %s327
          %s329 = sshll.u32 [#allocation9], 4
          %s330 = int_to_ptr.vmem [resolvable:$true] %s329
          %335 = dma.hbm_to_vmem [thread:$0]  %s1, 256, %s330, [#allocation10], 64, 64, 4
        $region16: #{tpu_custom_call.1} parent=11 // pred_fallthru
          _
        // Predicated region
        $region17: #{tpu_custom_call.1} parent=11 // pred_check
          %p336 = pneg %p110
        $region18: #{tpu_custom_call.1} parent=11 // pred_check_branch
          %338 = sbr.rel (%p336) target = $region20
        $region19: #{tpu_custom_call.1} parent=11 // pred_region
          _
        $region20: #{tpu_custom_call.1} parent=11 // pred_fallthru
          _
        // Predicated region
        $region21: #{tpu_custom_call.1} parent=11 // pred_check
          %p339 = pneg %p131
        $region22: #{tpu_custom_call.1} parent=11 // pred_check_branch
          %341 = sbr.rel (%p339) target = $region24
        $region23: #{tpu_custom_call.1} parent=11 // pred_region
          _
        $region24: #{tpu_custom_call.1} parent=11 // pred_fallthru
          _
        // Predicated region
        $region25: #{tpu_custom_call.1} parent=11 // pred_check
          %p342 = pneg %p152
        $region26: #{tpu_custom_call.1} parent=11 // pred_check_branch
          %344 = sbr.rel (%p342) target = $region28
        $region27: #{tpu_custom_call.1} parent=11 // pred_region
          _
        $region28: #{tpu_custom_call.1} parent=11 // pred_fallthru
          _
        // Predicated region
        $region29: #{tpu_custom_call.1} parent=11 // pred_check
          %p345 = pneg %p173
        $region30: #{tpu_custom_call.1} parent=11 // pred_check_branch
          %347 = sbr.rel (%p345) target = $region32
        $region31: #{tpu_custom_call.1} parent=11 // pred_region
          %s349 = ssub.s32 1024, 1024
          %350 = vsyncadd [#allocation10], %s349
          %s351 = sshll.u32 [#allocation11], 4
          %s352 = int_to_ptr.vmem [resolvable:$true] %s351
          %357 = dma.hbm_to_vmem [thread:$0]  %s5, 1024, %s352, [#allocation10], 64, 64, 4
        $region32: #{tpu_custom_call.1} parent=11 // pred_fallthru
          _
        // Predicated region
        $region33: #{tpu_custom_call.1} parent=11 // pred_check
          %p358 = pneg %p194
        $region34: #{tpu_custom_call.1} parent=11 // pred_check_branch
          %360 = sbr.rel (%p358) target = $region36
        $region35: #{tpu_custom_call.1} parent=11 // pred_region
          _
        $region36: #{tpu_custom_call.1} parent=11 // pred_fallthru
          _
        // Predicated region
        $region37: #{tpu_custom_call.1} parent=11 // pred_check
          %p361 = pneg %p215
        $region38: #{tpu_custom_call.1} parent=11 // pred_check_branch
          %363 = sbr.rel (%p361) target = $region40
        $region39: #{tpu_custom_call.1} parent=11 // pred_region
          _
        $region40: #{tpu_custom_call.1} parent=11 // pred_fallthru
          _
        // Predicated region
        $region41: #{tpu_custom_call.1} parent=11 // pred_check
          %p364 = pneg %p236
        $region42: #{tpu_custom_call.1} parent=11 // pred_check_branch
          %366 = sbr.rel (%p364) target = $region44
        $region43: #{tpu_custom_call.1} parent=11 // pred_region
          _
        $region44: #{tpu_custom_call.1} parent=11 // pred_fallthru
          _
        // Predicated region
        $region45: #{tpu_custom_call.1} parent=11 // pred_check
          %p367 = pneg %p257
        $region46: #{tpu_custom_call.1} parent=11 // pred_check_branch
          %369 = sbr.rel (%p367) target = $region48
        $region47: #{tpu_custom_call.1} parent=11 // pred_region
          _
        $region48: #{tpu_custom_call.1} parent=11 // pred_fallthru
          _
        // Predicated region
        $region49: #{tpu_custom_call.1} parent=11 // pred_check
          %p370 = pneg %p278
        $region50: #{tpu_custom_call.1} parent=11 // pred_check_branch
          %372 = sbr.rel (%p370) target = $region52
        $region51: #{tpu_custom_call.1} parent=11 // pred_region
          _
        $region52: #{tpu_custom_call.1} parent=11 // pred_fallthru
          _
      $region12: #{tpu_custom_call.1} parent=5 // pred_fallthru
        _
      %p373 = scmp.lt.s32.totalorder %s26, 3
      // Predicated region
      $region53: #{tpu_custom_call.1} parent=5 // pred_check
        %p374 = pneg %p373
      $region54: #{tpu_custom_call.1} parent=5 // pred_check_branch
        %376 = sbr.rel (%p374) target = $region56
      $region55: #{tpu_custom_call.1} parent=5 // pred_region
        // Predicated region
        $region57: #{tpu_custom_call.1} parent=55 // pred_check
          %p377 = pneg %p62
        $region58: #{tpu_custom_call.1} parent=55 // pred_check_branch
          %379 = sbr.rel (%p377) target = $region60
        $region59: #{tpu_custom_call.1} parent=55 // pred_region
          %s380 = sand.u32 %s52, 1
          %s381 = scalar_lea.sflag [#allocation7], %s380
          %s382 = sand.u32 %s52, 1
          %s383 = smul.addr %s382, 8
          %s384 = scalar_lea.vmem [#allocation6], %s383
          %p385 = scmp.eq.s32.totalorder %s33, 0
          %s386 = scalar_select %p385, %s34, 0
          %s388 = ssub.s32 128, 128
          %389 = vsyncadd %s381, %s388
          %s390 = smul.addr %s386, 128
          %s391 = scalar_lea.hbm %s0, %s390
          %s393 = sshll.u32 %s384, 4
          %s394 = int_to_ptr.vmem [resolvable:$true] %s393
          %396 = dma.hbm_to_vmem [thread:$0]  %s391, 128, %s394, %s381
        $region60: #{tpu_custom_call.1} parent=55 // pred_fallthru
          _
      $region56: #{tpu_custom_call.1} parent=5 // pred_fallthru
        _
      %p397 = scmp.le.s32.totalorder 1, %s26
      %p398 = scmp.lt.s32.totalorder %s26, 4
      %p399 = pnand %p397, %p398
      %p400 = pneg %p399
      // Predicated region
      $region61: #{tpu_custom_call.1} parent=5 // pred_check
        _
      $region62: #{tpu_custom_call.1} parent=5 // pred_check_branch
        %402 = sbr.rel (%p399) target = $region64
      $region63: #{tpu_custom_call.1} parent=5 // pred_region
        %s403 = ssub.s32 %s26, 1
        %s404 = sand.u32 %s55, 1
        %s405 = scalar_lea.sflag [#allocation7], %s404
        %s406 = sand.u32 %s55, 1
        %s407 = smul.addr %s406, 8
        %s408 = scalar_lea.vmem [#allocation6], %s407
        // Predicated region
        $region65: #{tpu_custom_call.1} parent=63 // pred_check
          %p409 = pneg %p68
        $region66: #{tpu_custom_call.1} parent=63 // pred_check_branch
          %411 = sbr.rel (%p409) target = $region68
        $region67: #{tpu_custom_call.1} parent=63 // pred_region
          %412 = dma.done %s405, 128
        $region68: #{tpu_custom_call.1} parent=63 // pred_fallthru
          _
        // Predicated region
        $region69: #{tpu_custom_call.1} parent=63 // pred_check
          %p413 = pneg %p89
        $region70: #{tpu_custom_call.1} parent=63 // pred_check_branch
          %415 = sbr.rel (%p413) target = $region72
        $region71: #{tpu_custom_call.1} parent=63 // pred_region
          %416 = dma.done [#allocation10], 256
        $region72: #{tpu_custom_call.1} parent=63 // pred_fallthru
          _
        // Predicated region
        $region73: #{tpu_custom_call.1} parent=63 // pred_check
          %p417 = pneg %p173
        $region74: #{tpu_custom_call.1} parent=63 // pred_check_branch
          %419 = sbr.rel (%p417) target = $region76
        $region75: #{tpu_custom_call.1} parent=63 // pred_region
          %420 = dma.done [#allocation10], 1024
        $region76: #{tpu_custom_call.1} parent=63 // pred_fallthru
          _
        %s421 = sand.u32 %s55, 1
        %s422 = scalar_lea.sflag [#allocation7], %s421
        %s423 = sand.u32 %s55, 1
        %s424 = smul.addr %s423, 8
        %s425 = scalar_lea.vmem [#allocation6], %s424
        %p426 = pneg %p68
        %p427 = pneg %p65
        %p428 = pneg %p89
        %p429 = pneg %p86
        %p430 = pneg %p110
        %p431 = pneg %p107
        %p432 = pneg %p131
        %p433 = pneg %p128
        %p434 = pneg %p152
        %p435 = pneg %p149
        %p436 = pneg %p173
        %p437 = pneg %p170
        %p438 = pneg %p194
        %p439 = pneg %p191
        %p440 = pneg %p215
        %p441 = pneg %p212
        %p442 = pneg %p236
        %p443 = pneg %p233
        %p444 = pneg %p257
        %p445 = pneg %p254
        %p446 = pneg %p278
        %p447 = pneg %p275
        %p448 = pneg %p308
        %p449 = pneg %p305
        %s450 = sand.u32 %s295, 1
        %s451 = scalar_lea.sflag [#allocation8], %s450
        %s452 = sand.u32 %s295, 1
        %s453 = scalar_lea.vmem [#allocation12], %s452
        %p454 = scmp.eq.s32.totalorder %s35, 0
        %s455 = scalar_select %p454, %s36, 0
        %p456 = scmp.eq.s32.totalorder %s35, 2
        %s457 = scalar_select %p456, %s36, 0
        %s459 = smul.u32 %s36, 8
        %p460 = scmp.eq.s32.totalorder %s35, 0
        // Predicated region
        $region77: #{tpu_custom_call.1} parent=63 // pred_check
          %p461 = pneg %p460
        $region78: #{tpu_custom_call.1} parent=63 // pred_check_branch
          %463 = sbr.rel (%p461) target = $region80
        $region79: #{tpu_custom_call.1} parent=63 // pred_region
          %p464 = scmp.eq.s32.totalorder %s36, 0
          // Predicated region
          $region81: #{tpu_custom_call.1} parent=79 // pred_check
            %p465 = pneg %p464
          $region82: #{tpu_custom_call.1} parent=79 // pred_check_branch
            %467 = sbr.rel (%p465) target = $region84
          $region83: #{tpu_custom_call.1} parent=79 // pred_region
            %468 = vst [vmem:[#allocation4] sm:$0xff] 0.0
          $region84: #{tpu_custom_call.1} parent=79 // pred_fallthru
            _
          %v469 = vld [vmem:[%s408] sm:$0xff]
          %v470 = vpack.c.bf16 %v469, %v469
          %v471 = vld [vmem:[#allocation9] sm:$0xf]
          %v472 = vld [vmem:[#allocation9 + $0x4] sm:$0xf]
          %v473 = vld [vmem:[#allocation9 + $0x8] sm:$0xf]
          %v474 = vld [vmem:[#allocation9 + $0xc] sm:$0xf]
          %v475 = vld [vmem:[%s2] sm:$0x1]
          %v477 = vlaneseq
          %v478 = vshrl.u32 %v477, 7
          %v479 = vsub.s32 0, %v478
          %v480 = vrot.slane %v475, %v479
          %v486 = vunpack.c.l.b16 %v471
          %v487 = vunpack.c.l.b16 %v472
          %v488 = vunpack.c.l.b16 %v473
          %v489 = vunpack.c.l.b16 %v474
          %v490 = vpack.c.b16 %v487, %v486
          %v491 = vpack.c.b16 %v489, %v488
          %vm494 = vcmask 261120
          %v496 = vsel %vm494, %v470, 0
          %498 = vmatprep.subr.bf16.mxu0 0
          %499 = vmatpush1.bf16.msra.mxu0 %v490
          %500 = vmatprep.subr.bf16.mxu0 0
          %501 = vmatpush1.bf16.msra.mxu0 %v491
          %502 = vmatprep.subr.bf16.mxu0 0
          %503 = vmatpush1.bf16.msra.mxu0 0
          %504 = vmatprep.subr.bf16.mxu0 0
          %505 = vmatpush1.bf16.msra.mxu0 0
          %506 = vmatprep.subr.bf16.mxu0 0
          %507 = vmatpush1.bf16.msra.mxu0 0
          %508 = vmatprep.subr.bf16.mxu0 0
          %509 = vmatpush1.bf16.msra.mxu0 0
          %510 = vmatprep.subr.bf16.mxu0 0
          %511 = vmatpush1.bf16.msra.mxu0 0
          %512 = vmatprep.subr.bf16.mxu0 0
          %513 = vmatpush1.bf16.msra.mxu0 0
          %514 = vmatprep.subr.bf16.mxu0 0
          %515 = vmatpush1.bf16.msra.mxu0 0
          %516 = vmatprep.subr.bf16.mxu0 0
          %517 = vmatpush1.bf16.msra.mxu0 0
          %518 = vmatprep.subr.bf16.mxu0 0
          %519 = vmatpush1.bf16.msra.mxu0 0
          %520 = vmatprep.subr.bf16.mxu0 0
          %521 = vmatpush1.bf16.msra.mxu0 0
          %522 = vmatprep.subr.bf16.mxu0 0
          %523 = vmatpush1.bf16.msra.mxu0 0
          %524 = vmatprep.subr.bf16.mxu0 0
          %525 = vmatpush1.bf16.msra.mxu0 0
          %526 = vmatprep.subr.bf16.mxu0 0
          %527 = vmatpush1.bf16.msra.mxu0 0
          %528 = vmatprep.subr.bf16.mxu0 0
          %529 = vmatpush1.bf16.msra.mxu0 0
          %530 = vmatprep.mubr.bf16.mxu0 0
          %531 = vmatmul.mubr.bf16.gmra.mrb[0].mxu0 %v496
          %v532 = vpop.f32.mrb[0].mxu0
          %v533 = vadd.f32 %v480, %v532
          %v534 = vpop.f32.mrb[0].mxu0
          %v535 = vpop.f32.mrb[0].mxu0
          %v536 = vpop.f32.mrb[0].mxu0
          %537 = vdwg.mxu0
          %v538 = vmax.f32 %v533, 0.0
          %v539 = vpack.c.bf16 %v538, %v538
          %s540 = sshra.s32 %s459, 3
          %s541 = sand.u32 %s459, 7
          %s542 = smul.addr %s540, 4
          %s543 = scalar_lea.vmem [#allocation2], %s542
          %544 = vst [vmem:[%s543] sm:$0xf] %v539
          %v545 = vld [vmem:[#allocation4] sm:$0x3]
          %v546 = vrot.slane %v538, 4
          %v547 = vadd.f32 %v538, %v546
          %v548 = vrot.slane %v547, 2
          %v549 = vadd.f32 %v547, %v548
          %v550 = vrot.slane %v549, 1
          %v551 = vadd.f32 %v549, %v550
          %v552 = vmul.f32 %v538, %v538
          %v553 = vrot.slane %v552, 4
          %v554 = vadd.f32 %v552, %v553
          %v555 = vrot.slane %v554, 2
          %v556 = vadd.f32 %v554, %v555
          %v557 = vrot.slane %v556, 1
          %v558 = vadd.f32 %v556, %v557
          %vm559 = vcmask 1040384
          %v560 = vsel %vm559, %v551, %v558
          %v561 = vadd.f32 %v545, %v560
          %562 = vst [vmem:[#allocation4] sm:$0x3] %v561
          // Predicated region
          $region85: #{tpu_custom_call.1} parent=79 // pred_check
            %p563 = pneg %p464
          $region86: #{tpu_custom_call.1} parent=79 // pred_check_branch
            %565 = sbr.rel (%p563) target = $region88
          $region87: #{tpu_custom_call.1} parent=79 // pred_region
            %v566 = vld [vmem:[#allocation4] sm:$0x3]
            %v567 = vmul.f32 %v566, 0.125
            %v568 = vmul.f32 %v567, %v567
            %v570 = vrot.slane %v568, 7
            %v572 = vsub.f32 %v567, %v570
            %v573 = vmax.f32 %v572, 0.0
            %v574 = vld [vmem:[%s3] sm:$0x1]
            %v575 = vadd.f32 %v573, 1e-05
            %v576 = vrsqrt.pop %v575
            %v579 = vunpack.c.l.s4 1966171168
            %v580 = vunpack.c.0.s8 %v579
            %v581 = vlaneseq
            %v582 = vshrl.u32 %v581, 7
            %v583 = vsub.s32 %v580, %v582
            %v584 = vrot.slane %v576, %v583
            %v585 = vcombine.high %v584, %v584
            %v587 = vunpack.c.l.s4 1966171168
            %v588 = vunpack.c.0.s8 %v587
            %v589 = vlaneseq
            %v590 = vshrl.u32 %v589, 7
            %v591 = vsub.s32 %v588, %v590
            %v592 = vrot.slane %v585, %v591
            %v594 = vmul.f32 %v574, %v592
            %v595 = vld [vmem:[%s4] sm:$0x1]
            %v596 = vmul.f32 %v567, %v594
            %v597 = vsub.f32 %v595, %v596
            %v599 = vlaneseq
            %v600 = vshrl.u32 %v599, 7
            %v601 = vsub.s32 0, %v600
            %v602 = vrot.slane %v597, %v601
            %v604 = vsel %vm559, %v594, %v602
            %605 = vst [vmem:[#allocation4 + $0x2] sm:$0x3] %v604
          $region88: #{tpu_custom_call.1} parent=79 // pred_fallthru
            _
        $region80: #{tpu_custom_call.1} parent=63 // pred_fallthru
          _
        %p606 = scmp.eq.s32.totalorder %s35, 1
        // Predicated region
        $region89: #{tpu_custom_call.1} parent=63 // pred_check
          %p607 = pneg %p606
        $region90: #{tpu_custom_call.1} parent=63 // pred_check_branch
          %609 = sbr.rel (%p607) target = $region92
        $region91: #{tpu_custom_call.1} parent=63 // pred_region
          %v610 = vld [vmem:[#allocation4 + $0x2] sm:$0x3]
          %s611 = sshra.s32 %s459, 3
          %s612 = sand.u32 %s459, 7
          %s613 = smul.addr %s611, 4
          %s614 = scalar_lea.vmem [#allocation2], %s613
          %v615 = vld [vmem:[%s614] sm:$0xf]
          %v616 = vunpack.c.l.bf16 %v615
          %v617 = vlaneseq
          %v618 = vshrl.u32 %v617, 7
          %v619 = vsub.s32 0, %v618
          %v620 = vrot.slane %v610, %v619
          %v621 = vmul.f32 %v616, %v620
          %v622 = vlaneseq
          %v623 = vshrl.u32 %v622, 7
          %v624 = vsub.s32 1, %v623
          %v625 = vrot.slane %v610, %v624
          %v626 = vadd.f32 %v621, %v625
          %v627 = vpack.c.bf16 %v626, %v626
          %v628 = vld [vmem:[#allocation11] sm:$0xf]
          %v629 = vld [vmem:[#allocation11 + $0x4] sm:$0xf]
          %v630 = vld [vmem:[#allocation11 + $0x8] sm:$0xf]
          %v631 = vld [vmem:[#allocation11 + $0xc] sm:$0xf]
          %v632 = vld [vmem:[#allocation11 + $0x10] sm:$0xf]
          %v633 = vld [vmem:[#allocation11 + $0x14] sm:$0xf]
          %v634 = vld [vmem:[#allocation11 + $0x18] sm:$0xf]
          %v635 = vld [vmem:[#allocation11 + $0x1c] sm:$0xf]
          %v636 = vld [vmem:[#allocation11 + $0x20] sm:$0xf]
          %v637 = vld [vmem:[#allocation11 + $0x24] sm:$0xf]
          %v638 = vld [vmem:[#allocation11 + $0x28] sm:$0xf]
          %v639 = vld [vmem:[#allocation11 + $0x2c] sm:$0xf]
          %v640 = vld [vmem:[#allocation11 + $0x30] sm:$0xf]
          %v641 = vld [vmem:[#allocation11 + $0x34] sm:$0xf]
          %v642 = vld [vmem:[#allocation11 + $0x38] sm:$0xf]
          %v643 = vld [vmem:[#allocation11 + $0x3c] sm:$0xf]
          %v644 = vld [vmem:[%s6] sm:$0x1]
          %v646 = vlaneseq
          %v647 = vshrl.u32 %v646, 7
          %v648 = vsub.s32 0, %v647
          %v649 = vrot.slane %v644, %v648
          %v667 = vunpack.c.l.b16 %v628
          %v668 = vunpack.c.l.b16 %v629
          %v669 = vunpack.c.l.b16 %v630
          %v670 = vunpack.c.l.b16 %v631
          %v671 = vunpack.c.l.b16 %v632
          %v672 = vunpack.c.l.b16 %v633
          %v673 = vunpack.c.l.b16 %v634
          %v674 = vunpack.c.l.b16 %v635
          %v675 = vunpack.c.l.b16 %v636
          %v676 = vunpack.c.l.b16 %v637
          %v677 = vunpack.c.l.b16 %v638
          %v678 = vunpack.c.l.b16 %v639
          %v679 = vunpack.c.l.b16 %v640
          %v680 = vunpack.c.l.b16 %v641
          %v681 = vunpack.c.l.b16 %v642
          %v682 = vunpack.c.l.b16 %v643
          %v683 = vpack.c.b16 %v668, %v667
          %v684 = vpack.c.b16 %v670, %v669
          %v685 = vpack.c.b16 %v672, %v671
          %v686 = vpack.c.b16 %v674, %v673
          %v687 = vpack.c.b16 %v676, %v675
          %v688 = vpack.c.b16 %v678, %v677
          %v689 = vpack.c.b16 %v680, %v679
          %v690 = vpack.c.b16 %v682, %v681
          %699 = vmatprep.subr.bf16.mxu0 0
          %700 = vmatpush1.bf16.msra.mxu0 %v683
          %701 = vmatprep.subr.bf16.mxu0 0
          %702 = vmatpush1.bf16.msra.mxu0 %v684
          %703 = vmatprep.subr.bf16.mxu0 0
          %704 = vmatpush1.bf16.msra.mxu0 %v685
          %705 = vmatprep.subr.bf16.mxu0 0
          %706 = vmatpush1.bf16.msra.mxu0 %v686
          %707 = vmatprep.subr.bf16.mxu0 0
          %708 = vmatpush1.bf16.msra.mxu0 %v687
          %709 = vmatprep.subr.bf16.mxu0 0
          %710 = vmatpush1.bf16.msra.mxu0 %v688
          %711 = vmatprep.subr.bf16.mxu0 0
          %712 = vmatpush1.bf16.msra.mxu0 %v689
          %713 = vmatprep.subr.bf16.mxu0 0
          %714 = vmatpush1.bf16.msra.mxu0 %v690
          %715 = vmatprep.subr.bf16.mxu0 0
          %716 = vmatpush1.bf16.msra.mxu0 0
          %717 = vmatprep.subr.bf16.mxu0 0
          %718 = vmatpush1.bf16.msra.mxu0 0
          %719 = vmatprep.subr.bf16.mxu0 0
          %720 = vmatpush1.bf16.msra.mxu0 0
          %721 = vmatprep.subr.bf16.mxu0 0
          %722 = vmatpush1.bf16.msra.mxu0 0
          %723 = vmatprep.subr.bf16.mxu0 0
          %724 = vmatpush1.bf16.msra.mxu0 0
          %725 = vmatprep.subr.bf16.mxu0 0
          %726 = vmatpush1.bf16.msra.mxu0 0
          %727 = vmatprep.subr.bf16.mxu0 0
          %728 = vmatpush1.bf16.msra.mxu0 0
          %729 = vmatprep.subr.bf16.mxu0 0
          %730 = vmatpush1.bf16.msra.mxu0 0
          %731 = vmatprep.mubr.bf16.mxu0 0
          %732 = vmatmul.mubr.bf16.gmra.mrb[0].mxu0 %v627
          %v733 = vpop.f32.mrb[0].mxu0
          %v734 = vadd.f32 %v649, %v733
          %v735 = vpop.f32.mrb[0].mxu0
          %v736 = vpop.f32.mrb[0].mxu0
          %v737 = vpop.f32.mrb[0].mxu0
          %738 = vdwg.mxu0
          %v739 = vmax.f32 %v734, 0.0
          %v740 = vpack.c.bf16 %v739, %v739
          %s741 = smul.addr %s611, 4
          %s742 = scalar_lea.vmem [#allocation3], %s741
          %743 = vst [vmem:[%s742] sm:$0xf] %v740
          %v744 = vld [vmem:[#allocation4 + $0x4] sm:$0x3]
          %v745 = vrot.slane %v739, 4
          %v746 = vadd.f32 %v739, %v745
          %v747 = vrot.slane %v746, 2
          %v748 = vadd.f32 %v746, %v747
          %v749 = vrot.slane %v748, 1
          %v750 = vadd.f32 %v748, %v749
          %v751 = vmul.f32 %v739, %v739
          %v752 = vrot.slane %v751, 4
          %v753 = vadd.f32 %v751, %v752
          %v754 = vrot.slane %v753, 2
          %v755 = vadd.f32 %v753, %v754
          %v756 = vrot.slane %v755, 1
          %v757 = vadd.f32 %v755, %v756
          %vm758 = vcmask 1040384
          %v759 = vsel %vm758, %v750, %v757
          %v760 = vadd.f32 %v744, %v759
          %761 = vst [vmem:[#allocation4 + $0x4] sm:$0x3] %v760
          %p762 = scmp.eq.s32.totalorder %s36, 0
          // Predicated region
          $region93: #{tpu_custom_call.1} parent=91 // pred_check
            %p763 = pneg %p762
          $region94: #{tpu_custom_call.1} parent=91 // pred_check_branch
            %765 = sbr.rel (%p763) target = $region96
          $region95: #{tpu_custom_call.1} parent=91 // pred_region
            %v766 = vld [vmem:[#allocation4 + $0x4] sm:$0x3]
            %v767 = vmul.f32 %v766, 0.125
            %v768 = vmul.f32 %v767, %v767
            %v770 = vrot.slane %v768, 7
            %v772 = vsub.f32 %v767, %v770
            %v773 = vmax.f32 %v772, 0.0
            %v774 = vld [vmem:[%s7] sm:$0x1]
            %v775 = vadd.f32 %v773, 1e-05
            %v776 = vrsqrt.pop %v775
            %v779 = vunpack.c.l.s4 1966171168
            %v780 = vunpack.c.0.s8 %v779
            %v781 = vlaneseq
            %v782 = vshrl.u32 %v781, 7
            %v783 = vsub.s32 %v780, %v782
            %v784 = vrot.slane %v776, %v783
            %v785 = vcombine.high %v784, %v784
            %v787 = vunpack.c.l.s4 1966171168
            %v788 = vunpack.c.0.s8 %v787
            %v789 = vlaneseq
            %v790 = vshrl.u32 %v789, 7
            %v791 = vsub.s32 %v788, %v790
            %v792 = vrot.slane %v785, %v791
            %v794 = vmul.f32 %v774, %v792
            %v795 = vld [vmem:[%s8] sm:$0x1]
            %v796 = vmul.f32 %v767, %v794
            %v797 = vsub.f32 %v795, %v796
            %v799 = vlaneseq
            %v800 = vshrl.u32 %v799, 7
            %v801 = vsub.s32 0, %v800
            %v802 = vrot.slane %v797, %v801
            %v804 = vsel %vm758, %v794, %v802
            %805 = vst [vmem:[#allocation4 + $0x6] sm:$0x3] %v804
          $region96: #{tpu_custom_call.1} parent=91 // pred_fallthru
            _
        $region92: #{tpu_custom_call.1} parent=63 // pred_fallthru
          _
        %p806 = scmp.eq.s32.totalorder %s35, 2
        // Predicated region
        $region97: #{tpu_custom_call.1} parent=63 // pred_check
          %p807 = pneg %p806
        $region98: #{tpu_custom_call.1} parent=63 // pred_check_branch
          %809 = sbr.rel (%p807) target = $region100
        $region99: #{tpu_custom_call.1} parent=63 // pred_region
          %v810 = vld [vmem:[#allocation4 + $0x6] sm:$0x3]
          %s811 = sshra.s32 %s459, 3
          %s812 = sand.u32 %s459, 7
          %s813 = smul.addr %s811, 4
          %s814 = scalar_lea.vmem [#allocation3], %s813
          %v815 = vld [vmem:[%s814] sm:$0xf]
          %v816 = vunpack.c.l.bf16 %v815
          %v817 = vlaneseq
          %v818 = vshrl.u32 %v817, 7
          %v819 = vsub.s32 0, %v818
          %v820 = vrot.slane %v810, %v819
          %v821 = vmul.f32 %v816, %v820
          %v822 = vlaneseq
          %v823 = vshrl.u32 %v822, 7
          %v824 = vsub.s32 1, %v823
          %v825 = vrot.slane %v810, %v824
          %v826 = vadd.f32 %v821, %v825
          %v827 = vld [vmem:[%s9] sm:$0x1]
          %v828 = vpack.c.bf16 %v826, %v826
          %v829 = vld [vmem:[#allocation5] sm:$0x1]
          %831 = vset.pattern.permute.xlu0 0
          %832 = vperm.xlu0 %831, %v829
          %v833 = vpop.permute.xlu0 %832
          %v835 = vlaneseq
          %v836 = vshrl.u32 %v835, 7
          %v837 = vsub.s32 0, %v836
          %v838 = vrot.slane %v833, %v837
          %839 = vmatprep.subr.bf16.mxu0 0
          %840 = vmatpush1.bf16.xpose.msra.mxu0 %v828
          %841 = vmatprep.subr.bf16.mxu0 0
          %842 = vmatpush1.bf16.xpose.msra.mxu0 0
          %843 = vmatprep.subr.bf16.mxu0 0
          %844 = vmatpush1.bf16.xpose.msra.mxu0 0
          %845 = vmatprep.subr.bf16.mxu0 0
          %846 = vmatpush1.bf16.xpose.msra.mxu0 0
          %847 = vmatprep.subr.bf16.mxu0 0
          %848 = vmatpush1.bf16.xpose.msra.mxu0 0
          %849 = vmatprep.subr.bf16.mxu0 0
          %850 = vmatpush1.bf16.xpose.msra.mxu0 0
          %851 = vmatprep.subr.bf16.mxu0 0
          %852 = vmatpush1.bf16.xpose.msra.mxu0 0
          %853 = vmatprep.subr.bf16.mxu0 0
          %854 = vmatpush1.bf16.xpose.msra.mxu0 0
          %855 = vmatprep.subr.bf16.mxu0 0
          %856 = vmatpush1.bf16.xpose.msra.mxu0 0
          %857 = vmatprep.subr.bf16.mxu0 0
          %858 = vmatpush1.bf16.xpose.msra.mxu0 0
          %859 = vmatprep.subr.bf16.mxu0 0
          %860 = vmatpush1.bf16.xpose.msra.mxu0 0
          %861 = vmatprep.subr.bf16.mxu0 0
          %862 = vmatpush1.bf16.xpose.msra.mxu0 0
          %863 = vmatprep.subr.bf16.mxu0 0
          %864 = vmatpush1.bf16.xpose.msra.mxu0 0
          %865 = vmatprep.subr.bf16.mxu0 0
          %866 = vmatpush1.bf16.xpose.msra.mxu0 0
          %867 = vmatprep.subr.bf16.mxu0 0
          %868 = vmatpush1.bf16.xpose.msra.mxu0 0
          %869 = vmatprep.subr.bf16.mxu0 0
          %870 = vmatpush1.bf16.xpose.msra.mxu0 0
          %871 = vmatprep.mubr.bf16.mxu0 0
          %872 = vmatmul.mubr.bf16.gmra.mrb[0].mxu0 %v827
          %v873 = vpop.f32.mrb[0].mxu0
          %v874 = vadd.f32 %v838, %v873
          %v875 = vpop.f32.mrb[0].mxu0
          %v876 = vpop.f32.mrb[0].mxu0
          %v877 = vpop.f32.mrb[0].mxu0
          %878 = vdwg.mxu0
          %vm879 = vcmask 57344
          %880 = vst.msk [vmem:[%s453] sm:$0x1] %vm879, %v874
        $region100: #{tpu_custom_call.1} parent=63 // pred_fallthru
          _
        %s881 = sand.u32 %s295, 1
        %s882 = scalar_lea.sflag [#allocation8], %s881
        %s883 = sand.u32 %s295, 1
        %s884 = scalar_lea.vmem [#allocation12], %s883
        // Predicated region
        $region101: #{tpu_custom_call.1} parent=63 // pred_check
          %p885 = pneg %p305
        $region102: #{tpu_custom_call.1} parent=63 // pred_check_branch
          %887 = sbr.rel (%p885) target = $region104
        $region103: #{tpu_custom_call.1} parent=63 // pred_region
          %p888 = scmp.eq.s32.totalorder %s35, 2
          %s889 = scalar_select %p888, %s36, 0
          %s891 = ssub.s32 16, 16
          %892 = vsyncadd %s882, %s891
          %s893 = smul.addr %s889, 16
          %s894 = scalar_lea.hbm %s11, %s893
          %s896 = sshll.u32 %s884, 4
          %s897 = int_to_ptr.vmem [resolvable:$true] %s896
          %899 = dma.vmem_to_hbm [thread:$0]  %s897, 16, %s894, %s882
        $region104: #{tpu_custom_call.1} parent=63 // pred_fallthru
          _
      $region64: #{tpu_custom_call.1} parent=5 // pred_fallthru
        _
      %p900 = scmp.le.s32.totalorder 2, %s26
      // Predicated region
      $region105: #{tpu_custom_call.1} parent=5 // pred_check
        %p901 = pneg %p900
      $region106: #{tpu_custom_call.1} parent=5 // pred_check_branch
        %903 = sbr.rel (%p901) target = $region108
      $region107: #{tpu_custom_call.1} parent=5 // pred_region
        %s904 = ssub.s32 %s26, 2
        // Predicated region
        $region109: #{tpu_custom_call.1} parent=107 // pred_check
          %p905 = pneg %p311
        $region110: #{tpu_custom_call.1} parent=107 // pred_check_branch
          %907 = sbr.rel (%p905) target = $region112
        $region111: #{tpu_custom_call.1} parent=107 // pred_region
          %s908 = sand.u32 %s296, 1
          %s909 = scalar_lea.sflag [#allocation8], %s908
          %s910 = sand.u32 %s296, 1
          %s911 = scalar_lea.vmem [#allocation12], %s910
          %912 = dma.done %s909, 16
        $region112: #{tpu_custom_call.1} parent=107 // pred_fallthru
          _
      $region108: #{tpu_custom_call.1} parent=5 // pred_fallthru
        _
    $region6: #{tpu_custom_call.1} parent=1 // loop_footer
      %s30 = sadd.s32 1, %s26
    $region7: #{tpu_custom_call.1} parent=1 // loop_footer_branch
      %25 = sbr.rel target = $region3
    $region8: #{tpu_custom_call.1} parent=1 // loop_exit
      _
    %913 = vsyncpa [#allocation7], 1
    %s914 = scalar_lea.sflag [#allocation7], 1
    %915 = vsyncpa %s914, 1
    %916 = vsyncpa [#allocation10], 1
    %917 = vsyncpa [#allocation8], 1
    %s918 = scalar_lea.sflag [#allocation8], 1
    %919 = vsyncpa %s918, 1

</llo_original>
